<compile_context>
chip_gen: v5e
topology: v5e:2x2
jax: 0.10.0
libtpu: 0.0.40
codegen_flags: <defaults>
</compile_context>

<pallas_src>
import functools

import jax
import jax.numpy as jnp
from jax import lax
from jax.experimental import pallas as pl
from jax.experimental.pallas import tpu as pltpu


def _round_up(x, m):
    return ((x + m - 1) // m) * m


def _clip_align_kernel(scale_ref,   # SMEM (1,) f32 : raw logit_scale (pre-exp)
                       img_ref,     # VMEM (tm, tk) f32/bf16 : image K-tile
                       wimg_ref,    # VMEM resident (F_p, D_p) or streamed (tk, D_p) bf16
                       bimg_ref,    # VMEM (1, D_p) f32
                       gt_ref,      # VMEM (D_p, B_g_p) bf16 : normalized g^T (resident)
                       out_ref,     # VMEM (tm, B_g_p) f32   : logits tile
                       acc_ref,     # VMEM (tm, D_p) f32     : img_emb accumulator
                       *, tk, nk, w_resident):
    k = pl.program_id(1)

    @pl.when(k == 0)
    def _init():
        acc_ref[...] = jnp.zeros_like(acc_ref)

    if w_resident:
        if nk == 1:
            w_tile = wimg_ref[...]
        else:
            w_tile = wimg_ref[pl.ds(pl.multiple_of(k * tk, 128), tk), :]
    else:
        w_tile = wimg_ref[...]

    # image encoder: partial matmul over this K tile (bf16 operands, f32 accumulate)
    acc_ref[...] += jnp.dot(img_ref[...].astype(jnp.bfloat16), w_tile,
                            preferred_element_type=jnp.float32)

    @pl.when(k == nk - 1)
    def _finalize():
        eps = jnp.float32(1e-12)
        img_emb = acc_ref[...] + bimg_ref[...]
        # F.normalize(p=2): x / max(||x||, eps) == x * rsqrt(max(sum(x^2), eps^2))
        ss = jnp.sum(img_emb * img_emb, axis=-1, keepdims=True)
        scale = jnp.exp(scale_ref[0])                        # scalar path (SMEM)
        # fold exp(logit_scale) into the D-wide embedding, then cast once to bf16
        img_n = img_emb * (scale * lax.rsqrt(jnp.maximum(ss, eps * eps)))
        # plain NN bf16 matmul against the resident, pre-normalized g^T
        out_ref[...] = jnp.dot(img_n.astype(jnp.bfloat16), gt_ref[...],
                               preferred_element_type=jnp.float32)


def graph_image_alignment(image_inputs, graph_feats, params):
    """Forward pass of GraphImageAlignmentModel.

    image_inputs : [B_img, C, H, W] float32 (NCHW, as in PyTorch)
    graph_feats  : [B_g, F_g]       float32 (graph-level features)
    params       : dict with w_img [C*H*W, D], b_img [D], w_g [F_g, D], b_g [D],
                   logit_scale [] (scalar, pre-exp).
    returns      : logits [B_img, B_g] float32
    """
    b_img = image_inputs.shape[0]
    b_g, f_g = graph_feats.shape
    img_flat = image_inputs.reshape(b_img, -1)
    f_img = img_flat.shape[1]
    d = params["w_img"].shape[1]

    d_p = _round_up(d, 128)
    b_g_p = _round_up(b_g, 128)

    # ---- graph encoder: tiny, one-shot, hoisted out of the kernel ----
    eps = jnp.float32(1e-12)
    g_emb = (jnp.dot(graph_feats.astype(jnp.float32),
                     params["w_g"].astype(jnp.float32),
                     preferred_element_type=jnp.float32)
             + params["b_g"].astype(jnp.float32))
    g_n = g_emb * lax.rsqrt(
        jnp.maximum(jnp.sum(g_emb * g_emb, -1, keepdims=True), eps * eps))
    # pre-transposed, bf16, zero-padded AFTER normalization: padded logits
    # columns are exactly zero (no garbage in the padded region).
    g_t = jnp.pad(g_n.T.astype(jnp.bfloat16),
                  ((0, d_p - d), (0, b_g_p - b_g)))

    # ---- tile selection (amortize per-step overhead, stay under VMEM budget) ----
    tm = min(512, _round_up(b_img, 8))
    if b_img >= 64 and _round_up(b_img, tm) // tm < 2:
        tm = _round_up(max(8, tm // 2), 8)          # >=2 m tiles for v7x megacore
    tk = min(4096, _round_up(f_img, 128))

    VMEM_BUDGET = 40 * 1024 * 1024                  # fits v7x's 64 MiB physical
    W_RESIDENT_BUDGET = 10 * 1024 * 1024
    while True:
        f_img_p = _round_up(f_img, tk)
        w_bytes = f_img_p * d_p * 2                 # bf16 resident weight
        w_resident = w_bytes <= W_RESIDENT_BUDGET
        est = (2 * tm * tk * 4                      # image tiles (worst case f32)
               + 2 * (w_bytes if w_resident else tk * d_p * 2)
               + 2 * d_p * b_g_p * 2                # resident g_n^T
               + 2 * tm * b_g_p * 4                 # output tiles
               + tm * d_p * 4)                      # f32 accumulator scratch
        if est <= VMEM_BUDGET or (tk <= 512 and tm <= 128):
            break
        if tk > 512:
            tk = max(128, _round_up(tk // 2, 128))
        else:
            tm = max(8, _round_up(tm // 2, 8))

    b_img_p = _round_up(b_img, tm)
    nk = f_img_p // tk
    grid = (b_img_p // tm, nk)

    # ---- glue: image streamed as-is when aligned (cast to bf16 in-kernel) ----
    if b_img_p != b_img or f_img_p != f_img:
        img = jnp.pad(img_flat.astype(jnp.float32),
                      ((0, b_img_p - b_img),
                       (0, f_img_p - f_img))).astype(jnp.bfloat16)
    else:
        img = img_flat                              # no extra HBM pad/cast pass

    w_img = jnp.pad(params["w_img"].astype(jnp.float32),
                    ((0, f_img_p - f_img), (0, d_p - d))).astype(jnp.bfloat16)
    b_img_vec = jnp.pad(params["b_img"].astype(jnp.float32).reshape(1, -1),
                        ((0, 0), (0, d_p - d)))
    scale = params["logit_scale"].reshape(1).astype(jnp.float32)

    if w_resident:
        w_spec = pl.BlockSpec((f_img_p, d_p), lambda m, k: (0, 0))   # DMAed once
    else:
        w_spec = pl.BlockSpec((tk, d_p), lambda m, k: (k, 0))        # streamed

    kernel = functools.partial(_clip_align_kernel,
                               tk=tk, nk=nk, w_resident=w_resident)

    out = pl.pallas_call(
        kernel,
        out_shape=jax.ShapeDtypeStruct((b_img_p, b_g_p), jnp.float32),
        grid_spec=pltpu.PrefetchScalarGridSpec(
            num_scalar_prefetch=0,
            grid=grid,
            in_specs=[
                # logit_scale scalar lives in SMEM (no padded VMEM tile / DMA)
                pl.BlockSpec(memory_space=pltpu.MemorySpace.SMEM),
                pl.BlockSpec((tm, tk), lambda m, k: (m, k)),       # image tile
                w_spec,                                            # w_img
                pl.BlockSpec((1, d_p), lambda m, k: (0, 0)),       # b_img
                pl.BlockSpec((d_p, b_g_p), lambda m, k: (0, 0)),   # g_n^T resident
            ],
            out_specs=pl.BlockSpec((tm, b_g_p), lambda m, k: (m, 0)),
            scratch_shapes=[pltpu.VMEM((tm, d_p), jnp.float32)],
        ),
        compiler_params=pltpu.CompilerParams(
            dimension_semantics=("parallel", "arbitrary"),
            vmem_limit_bytes=int(min(48 * 1024 * 1024,
                                     max(32 * 1024 * 1024, int(est * 3 // 2)))),
        ),
    )(scale, img, w_img, b_img_vec, g_t)

    return out[:b_img, :b_g]


def _reference(image_inputs, graph_feats, params, match_kernel=False):
    """Pure-JAX reference. match_kernel=True mirrors the kernel's bf16 MXU operands."""
    b = image_inputs.shape[0]
    img = image_inputs.reshape(b, -1).astype(jnp.float32)
    w_i = params["w_img"].astype(jnp.float32)
    if match_kernel:
        img = img.astype(jnp.bfloat16)
        w_i = w_i.astype(jnp.bfloat16)
    img_emb = jnp.dot(img, w_i, preferred_element_type=jnp.float32) + params["b_img"]
    g_emb = (graph_feats.astype(jnp.float32) @ params["w_g"].astype(jnp.float32)
             + params["b_g"])
    eps = jnp.float32(1e-12)
    img_n = img_emb * lax.rsqrt(
        jnp.maximum(jnp.sum(img_emb * img_emb, -1, keepdims=True), eps * eps))
    g_n = g_emb * lax.rsqrt(
        jnp.maximum(jnp.sum(g_emb * g_emb, -1, keepdims=True), eps * eps))
    scale = jnp.exp(params["logit_scale"])
    if match_kernel:
        return jnp.dot((scale * img_n).astype(jnp.bfloat16),
                       g_n.T.astype(jnp.bfloat16),
                       preferred_element_type=jnp.float32)
    return scale * (img_n @ g_n.T)


if __name__ == "__main__":
    # small shapes consistent with the forward pass
    B_IMG, C, H, W = 8, 4, 16, 16      # image batch (NCHW)
    B_G, F_G = 8, 16                   # graph batch, graph feature dim
    D = 32                             # embedding_dim

    key = jax.random.PRNGKey(0)
    k1, k2, k3, k4, k5, k6 = jax.random.split(key, 6)

    image_inputs = jax.random.normal(k1, (B_IMG, C, H, W), dtype=jnp.float32)
    graph_feats = jax.random.normal(k2, (B_G, F_G), dtype=jnp.float32)

    params = {
        "w_img": 0.02 * jax.random.normal(k3, (C * H * W, D), dtype=jnp.float32),
        "b_img": 0.01 * jax.random.normal(k4, (D,), dtype=jnp.float32),
        "w_g": 0.02 * jax.random.normal(k5, (F_G, D), dtype=jnp.float32),
        "b_g": 0.01 * jax.random.normal(k6, (D,), dtype=jnp.float32),
        # nn.Parameter(torch.ones([]) * log(1/0.07))
        "logit_scale": jnp.log(jnp.array(1.0 / 0.07, dtype=jnp.float32)),
    }

    logits = graph_image_alignment(image_inputs, graph_feats, params)
    logits = jax.block_until_ready(logits)
    assert logits.shape == (B_IMG, B_G)

    # tight check against a reference using the same bf16 MXU operands
    ref_match = _reference(image_inputs, graph_feats, params, match_kernel=True)
    err_match = jnp.max(jnp.abs(logits - ref_match))
    assert jnp.allclose(logits, ref_match, atol=2e-2, rtol=2e-2), (
        f"max abs err vs bf16-matched ref: {err_match}")

    # looser sanity check against the full-f32 reference (bf16 operand rounding)
    ref_f32 = _reference(image_inputs, graph_feats, params, match_kernel=False)
    err_f32 = jnp.max(jnp.abs(logits - ref_f32))
    assert jnp.allclose(logits, ref_f32, atol=3e-1, rtol=1e-1), (
        f"max abs err vs f32 ref: {err_f32}")

    print("KERNEL_OK")
</pallas_src>

<mosaic_0001>
module attributes {stable_mosaic.version = 11 : i64} {
  func.func @_clip_align_kernel(%arg0: i32, %arg1: i32, %arg2: memref<1xf32, #tpu.memory_space<smem>>, %arg3: memref<8x1024xf32, #tpu.memory_space<vmem>>, %arg4: memref<1024x128xbf16, #tpu.memory_space<vmem>>, %arg5: memref<1x128xf32, #tpu.memory_space<vmem>>, %arg6: memref<128x128xbf16, #tpu.memory_space<vmem>>, %arg7: memref<8x128xf32, #tpu.memory_space<vmem>>, %arg8: memref<8x128xf32, #tpu.memory_space<vmem>>) attributes {dimension_semantics = [#tpu.dimension_semantics<parallel>, #tpu.dimension_semantics<arbitrary>], iteration_bounds = array<i64: 1, 1>, scalar_prefetch = 0 : i64, scratch_operands = 1 : i64, tpu.core_type = #tpu.core_type<tc>, window_params = [{transform_indices = @transform_0, window_bounds = array<i64: 1>}, {transform_indices = @transform_1, window_bounds = array<i64: 8, 1024>}, {pipeline_mode = #tpu.pipeline_mode<synchronous>, transform_indices = @transform_2, window_bounds = array<i64: 1024, 128>}, {pipeline_mode = #tpu.pipeline_mode<synchronous>, transform_indices = @transform_3, window_bounds = array<i64: 1, 128>}, {pipeline_mode = #tpu.pipeline_mode<synchronous>, transform_indices = @transform_4, window_bounds = array<i64: 128, 128>}, {transform_indices = @transform_5, window_bounds = array<i64: 8, 128>}]} {
    %c0_i32 = arith.constant 0 : i32
    %0 = arith.cmpi eq, %arg1, %c0_i32 : i32
    %1 = arith.extui %0 : i1 to i32
    %c0_i32_0 = arith.constant 0 : i32
    %2 = arith.cmpi ne, %1, %c0_i32_0 : i32
    scf.if %2 {
      %cst_10 = arith.constant 0.000000e+00 : f32
      %13 = vector.broadcast %cst_10 : f32 to vector<8x128xf32>
      %c0_11 = arith.constant 0 : index
      %c0_12 = arith.constant 0 : index
      %14 = vector.load %arg8[%c0_11, %c0_12] : memref<8x128xf32, #tpu.memory_space<vmem>>, vector<8x128xf32>
      tpu.vector_store %arg8[%c0_11, %c0_12], %13 {strides = array<i32>} : memref<8x128xf32, #tpu.memory_space<vmem>>, vector<8x128xf32>,
    } else {
    }
    %c0 = arith.constant 0 : index
    %c0_1 = arith.constant 0 : index
    %3 = vector.load %arg4[%c0, %c0_1] : memref<1024x128xbf16, #tpu.memory_space<vmem>>, vector<1024x128xbf16>
    %c0_2 = arith.constant 0 : index
    %c0_3 = arith.constant 0 : index
    %4 = vector.load %arg8[%c0_2, %c0_3] : memref<8x128xf32, #tpu.memory_space<vmem>>, vector<8x128xf32>
    %c0_4 = arith.constant 0 : index
    %c0_5 = arith.constant 0 : index
    %5 = vector.load %arg3[%c0_4, %c0_5] : memref<8x1024xf32, #tpu.memory_space<vmem>>, vector<8x1024xf32>
    %6 = arith.truncf %5 : vector<8x1024xf32> to vector<8x1024xbf16>
    %cst = arith.constant dense<0.000000e+00> : vector<8x128xf32>
    %7 = tpu.matmul %6, %3, %cst {dimension_numbers = #tpu.dot_dimension_numbers<[1], [0], [0], [1], [0, 0, 1, 1], [], []>} : vector<8x1024xbf16>, vector<1024x128xbf16>, vector<8x128xf32> -> vector<8x128xf32>
    %8 = arith.addf %4, %7 : vector<8x128xf32>
    %c0_6 = arith.constant 0 : index
    %c0_7 = arith.constant 0 : index
    %9 = vector.load %arg8[%c0_6, %c0_7] : memref<8x128xf32, #tpu.memory_space<vmem>>, vector<8x128xf32>
    tpu.vector_store %arg8[%c0_6, %c0_7], %8 {strides = array<i32>} : memref<8x128xf32, #tpu.memory_space<vmem>>, vector<8x128xf32>,
    %c0_i32_8 = arith.constant 0 : i32
    %10 = arith.cmpi eq, %arg1, %c0_i32_8 : i32
    %11 = arith.extui %10 : i1 to i32
    %c0_i32_9 = arith.constant 0 : i32
    %12 = arith.cmpi ne, %11, %c0_i32_9 : i32
    scf.if %12 {
      %c0_10 = arith.constant 0 : index
      %c0_11 = arith.constant 0 : index
      %13 = vector.load %arg8[%c0_10, %c0_11] : memref<8x128xf32, #tpu.memory_space<vmem>>, vector<8x128xf32>
      %c0_12 = arith.constant 0 : index
      %c0_13 = arith.constant 0 : index
      %14 = vector.load %arg5[%c0_12, %c0_13] : memref<1x128xf32, #tpu.memory_space<vmem>>, vector<1x128xf32>
      %15 = vector.broadcast %14 : vector<1x128xf32> to vector<8x128xf32>
      %16 = arith.addf %13, %15 : vector<8x128xf32>
      %17 = arith.mulf %16, %16 : vector<8x128xf32>
      %cst_14 = arith.constant dense<0.000000e+00> : vector<8xf32>
      %18 = vector.multi_reduction <add>, %17, %cst_14 [1] : vector<8x128xf32> to vector<8xf32>
      %19 = vector.shape_cast %18 : vector<8xf32> to vector<8x1xf32>
      %c0_15 = arith.constant 0 : index
      %20 = memref.load %arg2[%c0_15] : memref<1xf32, #tpu.memory_space<smem>>
      %21 = math.exp %20 : f32
      %cst_16 = arith.constant 9.99999996E-13 : f32
      %cst_17 = arith.constant 9.99999996E-13 : f32
      %22 = arith.mulf %cst_16, %cst_17 : f32
      %23 = vector.broadcast %22 : f32 to vector<8x1xf32>
      %24 = arith.maximumf %19, %23 : vector<8x1xf32>
      %25 = math.rsqrt %24 : vector<8x1xf32>
      %26 = vector.broadcast %21 : f32 to vector<8x1xf32>
      %27 = arith.mulf %26, %25 : vector<8x1xf32>
      %28 = vector.broadcast %27 : vector<8x1xf32> to vector<8x128xf32>
      %29 = arith.mulf %16, %28 : vector<8x128xf32>
      %30 = arith.truncf %29 : vector<8x128xf32> to vector<8x128xbf16>
      %c0_18 = arith.constant 0 : index
      %c0_19 = arith.constant 0 : index
      %31 = vector.load %arg6[%c0_18, %c0_19] : memref<128x128xbf16, #tpu.memory_space<vmem>>, vector<128x128xbf16>
      %cst_20 = arith.constant dense<0.000000e+00> : vector<8x128xf32>
      %32 = tpu.matmul %30, %31, %cst_20 {dimension_numbers = #tpu.dot_dimension_numbers<[1], [0], [0], [1], [0, 0, 1, 1], [], []>} : vector<8x128xbf16>, vector<128x128xbf16>, vector<8x128xf32> -> vector<8x128xf32>
      %c0_21 = arith.constant 0 : index
      %c0_22 = arith.constant 0 : index
      %33 = vector.load %arg7[%c0_21, %c0_22] : memref<8x128xf32, #tpu.memory_space<vmem>>, vector<8x128xf32>
      tpu.vector_store %arg7[%c0_21, %c0_22], %32 {strides = array<i32>} : memref<8x128xf32, #tpu.memory_space<vmem>>, vector<8x128xf32>,
    } else {
    }
    return
  }
  func.func @transform_0(%arg0: i32, %arg1: i32) -> i32 {
    %c0_i32 = arith.constant 0 : i32
    %c0_i32_0 = arith.constant 0 : i32
    return %c0_i32 : i32
  }
  func.func @transform_1(%arg0: i32, %arg1: i32) -> (i32, i32) {
    %c0_i32 = arith.constant 0 : i32
    return %arg0, %arg1 : i32, i32
  }
  func.func @transform_2(%arg0: i32, %arg1: i32) -> (i32, i32) {
    %c0_i32 = arith.constant 0 : i32
    %c0_i32_0 = arith.constant 0 : i32
    %c0_i32_1 = arith.constant 0 : i32
    return %c0_i32, %c0_i32_0 : i32, i32
  }
  func.func @transform_3(%arg0: i32, %arg1: i32) -> (i32, i32) {
    %c0_i32 = arith.constant 0 : i32
    %c0_i32_0 = arith.constant 0 : i32
    %c0_i32_1 = arith.constant 0 : i32
    return %c0_i32, %c0_i32_0 : i32, i32
  }
  func.func @transform_4(%arg0: i32, %arg1: i32) -> (i32, i32) {
    %c0_i32 = arith.constant 0 : i32
    %c0_i32_0 = arith.constant 0 : i32
    %c0_i32_1 = arith.constant 0 : i32
    return %c0_i32, %c0_i32_0 : i32, i32
  }
  func.func @transform_5(%arg0: i32, %arg1: i32) -> (i32, i32) {
    %c0_i32 = arith.constant 0 : i32
    %c0_i32_0 = arith.constant 0 : i32
    return %arg0, %c0_i32 : i32, i32
  }
}

</mosaic_0001>

<llo_original>
// kernel: tpu_custom_call.1
$region0: #{tpu_custom_call.1}
  #allocation0 [shape = 'u32[]', space=smem, size = 0x4, offset = 0x4, fixed_abs, tag = 'smem constant byte address 0x4 - core index']
  #allocation1 [shape = 'u32[72,128]{1,0:T(1,128)}', space=vmem, size = 0x9000, scoped, tag = 'internal scratch']
  #allocation2 [shape = 'f32[8,128]{1,0:T(8,128)}', space=vmem, size = 0x1000, scoped, tag = 'scratch operand']
  #allocation3 [shape = 'f32[1]{0:T(128)S(6)}', space=smem, size = 0x200, scoped, tag = 'scoped memory for tpu_custom_call.1']
  %s0 = inlined_call_operand.<no memory space> [shape: f32[1], index: 0, kind: input, shape index: {}]
  %s1 = inlined_call_operand.hbm [shape: f32[8,1024], index: 1, kind: input, shape index: {}]
  %s2 = inlined_call_operand.hbm [shape: bf16[1024,128], index: 2, kind: input, shape index: {}]
  %s3 = inlined_call_operand.vmem [shape: f32[1,128], index: 3, kind: input, shape index: {}]
  %s4 = inlined_call_operand.hbm [shape: bf16[128,128], index: 4, kind: input, shape index: {}]
  %s5 = inlined_call_operand.hbm [shape: f32[8,128], index: 5, kind: output, shape index: {}]
  %s6 = sld [smem:[#allocation0]]
  $region50: #{tpu_custom_call.1} parent=0
    _
  %s8 = ssub.s32 1, %s6
  %s9 = scalar_select 0, %s8, %s6
  %10 = sst [smem:[#allocation3]] %s0
  $region1: #{tpu_custom_call.1} parent=0
    #allocation4 [shape = 'u8[32768]{0}', space=vmem, size = 0x8000, scoped, tag = 'input window, operand 1, single buffered']
    #allocation5 [shape = 's32[1]{0}', space=sflag, size = 0x4, scoped, tag = 'scoped memory for tpu_custom_call.1']
    #allocation6 [shape = 's32[1]{0}', space=sflag, size = 0x4, scoped, tag = 'scoped memory for tpu_custom_call.1']
    #allocation7 [shape = 'u8[262144]{0}', space=vmem, size = 0x40000, scoped, tag = 'input window, operand 2, single buffered']
    #allocation8 [shape = 's32[1]{0}', space=sflag, size = 0x4, scoped, tag = 'scoped memory for tpu_custom_call.1']
    #allocation9 [shape = 'u8[32768]{0}', space=vmem, size = 0x8000, scoped, tag = 'input window, operand 4, single buffered']
    #allocation10 [shape = 'u8[4096]{0}', space=vmem, size = 0x1000, scoped, tag = 'output window, operand 0, single buffered']
    %11 = vsyncpa [#allocation5], 0
    %12 = vsyncpa [#allocation8], 0
    %13 = vsyncpa [#allocation6], 0
    // Predicated region
    $region2: #{tpu_custom_call.1} parent=1 // pred_check
      _
    $region3: #{tpu_custom_call.1} parent=1 // pred_check_branch
      %15 = sbr.rel (0) target = $region5
    $region4: #{tpu_custom_call.1} parent=1 // pred_region
      _
    $region5: #{tpu_custom_call.1} parent=1 // pred_fallthru
      _
    // Predicated region
    $region6: #{tpu_custom_call.1} parent=1 // pred_check
      _
    $region7: #{tpu_custom_call.1} parent=1 // pred_check_branch
      %17 = sbr.rel (0) target = $region9
    $region8: #{tpu_custom_call.1} parent=1 // pred_region
      %19 = vsyncadd [#allocation5], 0
      %s21 = sshll.u32 %s1, 4
      %s22 = int_to_ptr.hbm [resolvable:$true] %s21
      %s23 = sshll.u32 [#allocation4], 4
      %s24 = int_to_ptr.vmem [resolvable:$true] %s23
      %26 = dma.hbm_to_vmem [thread:$0]  %s22, 1024, %s24, [#allocation5]
    $region9: #{tpu_custom_call.1} parent=1 // pred_fallthru
      _
    // Predicated region
    $region10: #{tpu_custom_call.1} parent=1 // pred_check
      _
    $region11: #{tpu_custom_call.1} parent=1 // pred_check_branch
      %28 = sbr.rel (0) target = $region13
    $region12: #{tpu_custom_call.1} parent=1 // pred_region
      %30 = vsyncadd [#allocation8], 0
      %s31 = sshll.u32 %s2, 4
      %s32 = int_to_ptr.hbm [resolvable:$true] %s31
      %s33 = sshll.u32 [#allocation7], 4
      %s34 = int_to_ptr.vmem [resolvable:$true] %s33
      %39 = dma.hbm_to_vmem [thread:$0]  %s32, 8192, %s34, [#allocation8], 64, 64, 4
    $region13: #{tpu_custom_call.1} parent=1 // pred_fallthru
      _
    // Predicated region
    $region14: #{tpu_custom_call.1} parent=1 // pred_check
      _
    $region15: #{tpu_custom_call.1} parent=1 // pred_check_branch
      %41 = sbr.rel (0) target = $region17
    $region16: #{tpu_custom_call.1} parent=1 // pred_region
      _
    $region17: #{tpu_custom_call.1} parent=1 // pred_fallthru
      _
    // Predicated region
    $region18: #{tpu_custom_call.1} parent=1 // pred_check
      _
    $region19: #{tpu_custom_call.1} parent=1 // pred_check_branch
      %43 = sbr.rel (0) target = $region21
    $region20: #{tpu_custom_call.1} parent=1 // pred_region
      %45 = vsyncadd [#allocation8], 0
      %s46 = sshll.u32 %s4, 4
      %s47 = int_to_ptr.hbm [resolvable:$true] %s46
      %s48 = sshll.u32 [#allocation9], 4
      %s49 = int_to_ptr.vmem [resolvable:$true] %s48
      %54 = dma.hbm_to_vmem [thread:$0]  %s47, 1024, %s49, [#allocation8], 64, 64, 4
    $region21: #{tpu_custom_call.1} parent=1 // pred_fallthru
      _
    // Predicated region
    $region22: #{tpu_custom_call.1} parent=1 // pred_check
      _
    $region23: #{tpu_custom_call.1} parent=1 // pred_check_branch
      %56 = sbr.rel (0) target = $region25
    $region24: #{tpu_custom_call.1} parent=1 // pred_region
      %58 = dma.done [#allocation5], 1024
    $region25: #{tpu_custom_call.1} parent=1 // pred_fallthru
      _
    // Predicated region
    $region26: #{tpu_custom_call.1} parent=1 // pred_check
      _
    $region27: #{tpu_custom_call.1} parent=1 // pred_check_branch
      %60 = sbr.rel (0) target = $region29
    $region28: #{tpu_custom_call.1} parent=1 // pred_region
      %62 = dma.done [#allocation8], 8192
    $region29: #{tpu_custom_call.1} parent=1 // pred_fallthru
      _
    // Predicated region
    $region30: #{tpu_custom_call.1} parent=1 // pred_check
      _
    $region31: #{tpu_custom_call.1} parent=1 // pred_check_branch
      %64 = sbr.rel (0) target = $region33
    $region32: #{tpu_custom_call.1} parent=1 // pred_region
      %66 = dma.done [#allocation8], 1024
    $region33: #{tpu_custom_call.1} parent=1 // pred_fallthru
      _
    %p67 = scmp.eq.s32.totalorder 0, 0
    // Predicated region
    $region34: #{tpu_custom_call.1} parent=1 // pred_check
      %p68 = pneg %p67
    $region35: #{tpu_custom_call.1} parent=1 // pred_check_branch
      %70 = sbr.rel (%p68) target = $region37
    $region36: #{tpu_custom_call.1} parent=1 // pred_region
      %71 = vst [vmem:[#allocation2] sm:$0xff] 0.0
    $region37: #{tpu_custom_call.1} parent=1 // pred_fallthru
      _
    %v72 = vld [vmem:[#allocation7] sm:$0xf]
    %v73 = vld [vmem:[#allocation7 + $0x4] sm:$0xf]
    %v74 = vld [vmem:[#allocation7 + $0x8] sm:$0xf]
    %v75 = vld [vmem:[#allocation7 + $0xc] sm:$0xf]
    %v76 = vld [vmem:[#allocation7 + $0x10] sm:$0xf]
    %v77 = vld [vmem:[#allocation7 + $0x14] sm:$0xf]
    %v78 = vld [vmem:[#allocation7 + $0x18] sm:$0xf]
    %v79 = vld [vmem:[#allocation7 + $0x1c] sm:$0xf]
    %v80 = vld [vmem:[#allocation7 + $0x20] sm:$0xf]
    %v81 = vld [vmem:[#allocation7 + $0x24] sm:$0xf]
    %v82 = vld [vmem:[#allocation7 + $0x28] sm:$0xf]
    %v83 = vld [vmem:[#allocation7 + $0x2c] sm:$0xf]
    %v84 = vld [vmem:[#allocation7 + $0x30] sm:$0xf]
    %v85 = vld [vmem:[#allocation7 + $0x34] sm:$0xf]
    %v86 = vld [vmem:[#allocation7 + $0x38] sm:$0xf]
    %v87 = vld [vmem:[#allocation7 + $0x3c] sm:$0xf]
    %v88 = vld [vmem:[#allocation7 + $0x40] sm:$0xf]
    %v89 = vld [vmem:[#allocation7 + $0x44] sm:$0xf]
    %v90 = vld [vmem:[#allocation7 + $0x48] sm:$0xf]
    %v91 = vld [vmem:[#allocation7 + $0x4c] sm:$0xf]
    %v92 = vld [vmem:[#allocation7 + $0x50] sm:$0xf]
    %v93 = vld [vmem:[#allocation7 + $0x54] sm:$0xf]
    %v94 = vld [vmem:[#allocation7 + $0x58] sm:$0xf]
    %v95 = vld [vmem:[#allocation7 + $0x5c] sm:$0xf]
    %v96 = vld [vmem:[#allocation7 + $0x60] sm:$0xf]
    %v97 = vld [vmem:[#allocation7 + $0x64] sm:$0xf]
    %v98 = vld [vmem:[#allocation7 + $0x68] sm:$0xf]
    %v99 = vld [vmem:[#allocation7 + $0x6c] sm:$0xf]
    %v100 = vld [vmem:[#allocation7 + $0x70] sm:$0xf]
    %v101 = vld [vmem:[#allocation7 + $0x74] sm:$0xf]
    %v102 = vld [vmem:[#allocation7 + $0x78] sm:$0xf]
    %v103 = vld [vmem:[#allocation7 + $0x7c] sm:$0xf]
    %v104 = vld [vmem:[#allocation7 + $0x80] sm:$0xf]
    %v105 = vld [vmem:[#allocation7 + $0x84] sm:$0xf]
    %v106 = vld [vmem:[#allocation7 + $0x88] sm:$0xf]
    %v107 = vld [vmem:[#allocation7 + $0x8c] sm:$0xf]
    %v108 = vld [vmem:[#allocation7 + $0x90] sm:$0xf]
    %v109 = vld [vmem:[#allocation7 + $0x94] sm:$0xf]
    %v110 = vld [vmem:[#allocation7 + $0x98] sm:$0xf]
    %v111 = vld [vmem:[#allocation7 + $0x9c] sm:$0xf]
    %v112 = vld [vmem:[#allocation7 + $0xa0] sm:$0xf]
    %v113 = vld [vmem:[#allocation7 + $0xa4] sm:$0xf]
    %v114 = vld [vmem:[#allocation7 + $0xa8] sm:$0xf]
    %v115 = vld [vmem:[#allocation7 + $0xac] sm:$0xf]
    %v116 = vld [vmem:[#allocation7 + $0xb0] sm:$0xf]
    %v117 = vld [vmem:[#allocation7 + $0xb4] sm:$0xf]
    %v118 = vld [vmem:[#allocation7 + $0xb8] sm:$0xf]
    %v119 = vld [vmem:[#allocation7 + $0xbc] sm:$0xf]
    %v120 = vld [vmem:[#allocation7 + $0xc0] sm:$0xf]
    %v121 = vld [vmem:[#allocation7 + $0xc4] sm:$0xf]
    %v122 = vld [vmem:[#allocation7 + $0xc8] sm:$0xf]
    %v123 = vld [vmem:[#allocation7 + $0xcc] sm:$0xf]
    %v124 = vld [vmem:[#allocation7 + $0xd0] sm:$0xf]
    %v125 = vld [vmem:[#allocation7 + $0xd4] sm:$0xf]
    %v126 = vld [vmem:[#allocation7 + $0xd8] sm:$0xf]
    %v127 = vld [vmem:[#allocation7 + $0xdc] sm:$0xf]
    %v128 = vld [vmem:[#allocation7 + $0xe0] sm:$0xf]
    %v129 = vld [vmem:[#allocation7 + $0xe4] sm:$0xf]
    %v130 = vld [vmem:[#allocation7 + $0xe8] sm:$0xf]
    %v131 = vld [vmem:[#allocation7 + $0xec] sm:$0xf]
    %v132 = vld [vmem:[#allocation7 + $0xf0] sm:$0xf]
    %v133 = vld [vmem:[#allocation7 + $0xf4] sm:$0xf]
    %v134 = vld [vmem:[#allocation7 + $0xf8] sm:$0xf]
    %v135 = vld [vmem:[#allocation7 + $0xfc] sm:$0xf]
    %v136 = vld [vmem:[#allocation7 + $0x100] sm:$0xf]
    %v137 = vld [vmem:[#allocation7 + $0x104] sm:$0xf]
    %v138 = vld [vmem:[#allocation7 + $0x108] sm:$0xf]
    %v139 = vld [vmem:[#allocation7 + $0x10c] sm:$0xf]
    %v140 = vld [vmem:[#allocation7 + $0x110] sm:$0xf]
    %v141 = vld [vmem:[#allocation7 + $0x114] sm:$0xf]
    %v142 = vld [vmem:[#allocation7 + $0x118] sm:$0xf]
    %v143 = vld [vmem:[#allocation7 + $0x11c] sm:$0xf]
    %v144 = vld [vmem:[#allocation7 + $0x120] sm:$0xf]
    %v145 = vld [vmem:[#allocation7 + $0x124] sm:$0xf]
    %v146 = vld [vmem:[#allocation7 + $0x128] sm:$0xf]
    %v147 = vld [vmem:[#allocation7 + $0x12c] sm:$0xf]
    %v148 = vld [vmem:[#allocation7 + $0x130] sm:$0xf]
    %v149 = vld [vmem:[#allocation7 + $0x134] sm:$0xf]
    %v150 = vld [vmem:[#allocation7 + $0x138] sm:$0xf]
    %v151 = vld [vmem:[#allocation7 + $0x13c] sm:$0xf]
    %v152 = vld [vmem:[#allocation7 + $0x140] sm:$0xf]
    %v153 = vld [vmem:[#allocation7 + $0x144] sm:$0xf]
    %v154 = vld [vmem:[#allocation7 + $0x148] sm:$0xf]
    %v155 = vld [vmem:[#allocation7 + $0x14c] sm:$0xf]
    %v156 = vld [vmem:[#allocation7 + $0x150] sm:$0xf]
    %v157 = vld [vmem:[#allocation7 + $0x154] sm:$0xf]
    %v158 = vld [vmem:[#allocation7 + $0x158] sm:$0xf]
    %v159 = vld [vmem:[#allocation7 + $0x15c] sm:$0xf]
    %v160 = vld [vmem:[#allocation7 + $0x160] sm:$0xf]
    %v161 = vld [vmem:[#allocation7 + $0x164] sm:$0xf]
    %v162 = vld [vmem:[#allocation7 + $0x168] sm:$0xf]
    %v163 = vld [vmem:[#allocation7 + $0x16c] sm:$0xf]
    %v164 = vld [vmem:[#allocation7 + $0x170] sm:$0xf]
    %v165 = vld [vmem:[#allocation7 + $0x174] sm:$0xf]
    %v166 = vld [vmem:[#allocation7 + $0x178] sm:$0xf]
    %v167 = vld [vmem:[#allocation7 + $0x17c] sm:$0xf]
    %v168 = vld [vmem:[#allocation7 + $0x180] sm:$0xf]
    %v169 = vld [vmem:[#allocation7 + $0x184] sm:$0xf]
    %v170 = vld [vmem:[#allocation7 + $0x188] sm:$0xf]
    %v171 = vld [vmem:[#allocation7 + $0x18c] sm:$0xf]
    %v172 = vld [vmem:[#allocation7 + $0x190] sm:$0xf]
    %v173 = vld [vmem:[#allocation7 + $0x194] sm:$0xf]
    %v174 = vld [vmem:[#allocation7 + $0x198] sm:$0xf]
    %v175 = vld [vmem:[#allocation7 + $0x19c] sm:$0xf]
    %v176 = vld [vmem:[#allocation7 + $0x1a0] sm:$0xf]
    %v177 = vld [vmem:[#allocation7 + $0x1a4] sm:$0xf]
    %v178 = vld [vmem:[#allocation7 + $0x1a8] sm:$0xf]
    %v179 = vld [vmem:[#allocation7 + $0x1ac] sm:$0xf]
    %v180 = vld [vmem:[#allocation7 + $0x1b0] sm:$0xf]
    %v181 = vld [vmem:[#allocation7 + $0x1b4] sm:$0xf]
    %v182 = vld [vmem:[#allocation7 + $0x1b8] sm:$0xf]
    %v183 = vld [vmem:[#allocation7 + $0x1bc] sm:$0xf]
    %v184 = vld [vmem:[#allocation7 + $0x1c0] sm:$0xf]
    %v185 = vld [vmem:[#allocation7 + $0x1c4] sm:$0xf]
    %v186 = vld [vmem:[#allocation7 + $0x1c8] sm:$0xf]
    %v187 = vld [vmem:[#allocation7 + $0x1cc] sm:$0xf]
    %v188 = vld [vmem:[#allocation7 + $0x1d0] sm:$0xf]
    %v189 = vld [vmem:[#allocation7 + $0x1d4] sm:$0xf]
    %v190 = vld [vmem:[#allocation7 + $0x1d8] sm:$0xf]
    %v191 = vld [vmem:[#allocation7 + $0x1dc] sm:$0xf]
    %v192 = vld [vmem:[#allocation7 + $0x1e0] sm:$0xf]
    %v193 = vld [vmem:[#allocation7 + $0x1e4] sm:$0xf]
    %v194 = vld [vmem:[#allocation7 + $0x1e8] sm:$0xf]
    %v195 = vld [vmem:[#allocation7 + $0x1ec] sm:$0xf]
    %v196 = vld [vmem:[#allocation7 + $0x1f0] sm:$0xf]
    %v197 = vld [vmem:[#allocation7 + $0x1f4] sm:$0xf]
    %v198 = vld [vmem:[#allocation7 + $0x1f8] sm:$0xf]
    %v199 = vld [vmem:[#allocation7 + $0x1fc] sm:$0xf]
    %v200 = vld [vmem:[#allocation2] sm:$0xff]
    %v201 = vld [vmem:[#allocation4] sm:$0xff]
    %v202 = vld [vmem:[#allocation4 + $0x8] sm:$0xff]
    %v203 = vld [vmem:[#allocation4 + $0x10] sm:$0xff]
    %v204 = vld [vmem:[#allocation4 + $0x18] sm:$0xff]
    %v205 = vld [vmem:[#allocation4 + $0x20] sm:$0xff]
    %v206 = vld [vmem:[#allocation4 + $0x28] sm:$0xff]
    %v207 = vld [vmem:[#allocation4 + $0x30] sm:$0xff]
    %v208 = vld [vmem:[#allocation4 + $0x38] sm:$0xff]
    %v209 = vpack.c.bf16 %v201, %v201
    %v210 = vpack.c.bf16 %v202, %v202
    %v211 = vpack.c.bf16 %v203, %v203
    %v212 = vpack.c.bf16 %v204, %v204
    %v213 = vpack.c.bf16 %v205, %v205
    %v214 = vpack.c.bf16 %v206, %v206
    %v215 = vpack.c.bf16 %v207, %v207
    %v216 = vpack.c.bf16 %v208, %v208
    %v345 = vunpack.c.l.b16 %v72
    %v346 = vunpack.c.l.b16 %v73
    %v347 = vunpack.c.l.b16 %v74
    %v348 = vunpack.c.l.b16 %v75
    %v349 = vunpack.c.l.b16 %v76
    %v350 = vunpack.c.l.b16 %v77
    %v351 = vunpack.c.l.b16 %v78
    %v352 = vunpack.c.l.b16 %v79
    %v353 = vunpack.c.l.b16 %v80
    %v354 = vunpack.c.l.b16 %v81
    %v355 = vunpack.c.l.b16 %v82
    %v356 = vunpack.c.l.b16 %v83
    %v357 = vunpack.c.l.b16 %v84
    %v358 = vunpack.c.l.b16 %v85
    %v359 = vunpack.c.l.b16 %v86
    %v360 = vunpack.c.l.b16 %v87
    %v361 = vunpack.c.l.b16 %v88
    %v362 = vunpack.c.l.b16 %v89
    %v363 = vunpack.c.l.b16 %v90
    %v364 = vunpack.c.l.b16 %v91
    %v365 = vunpack.c.l.b16 %v92
    %v366 = vunpack.c.l.b16 %v93
    %v367 = vunpack.c.l.b16 %v94
    %v368 = vunpack.c.l.b16 %v95
    %v369 = vunpack.c.l.b16 %v96
    %v370 = vunpack.c.l.b16 %v97
    %v371 = vunpack.c.l.b16 %v98
    %v372 = vunpack.c.l.b16 %v99
    %v373 = vunpack.c.l.b16 %v100
    %v374 = vunpack.c.l.b16 %v101
    %v375 = vunpack.c.l.b16 %v102
    %v376 = vunpack.c.l.b16 %v103
    %v377 = vunpack.c.l.b16 %v104
    %v378 = vunpack.c.l.b16 %v105
    %v379 = vunpack.c.l.b16 %v106
    %v380 = vunpack.c.l.b16 %v107
    %v381 = vunpack.c.l.b16 %v108
    %v382 = vunpack.c.l.b16 %v109
    %v383 = vunpack.c.l.b16 %v110
    %v384 = vunpack.c.l.b16 %v111
    %v385 = vunpack.c.l.b16 %v112
    %v386 = vunpack.c.l.b16 %v113
    %v387 = vunpack.c.l.b16 %v114
    %v388 = vunpack.c.l.b16 %v115
    %v389 = vunpack.c.l.b16 %v116
    %v390 = vunpack.c.l.b16 %v117
    %v391 = vunpack.c.l.b16 %v118
    %v392 = vunpack.c.l.b16 %v119
    %v393 = vunpack.c.l.b16 %v120
    %v394 = vunpack.c.l.b16 %v121
    %v395 = vunpack.c.l.b16 %v122
    %v396 = vunpack.c.l.b16 %v123
    %v397 = vunpack.c.l.b16 %v124
    %v398 = vunpack.c.l.b16 %v125
    %v399 = vunpack.c.l.b16 %v126
    %v400 = vunpack.c.l.b16 %v127
    %v401 = vunpack.c.l.b16 %v128
    %v402 = vunpack.c.l.b16 %v129
    %v403 = vunpack.c.l.b16 %v130
    %v404 = vunpack.c.l.b16 %v131
    %v405 = vunpack.c.l.b16 %v132
    %v406 = vunpack.c.l.b16 %v133
    %v407 = vunpack.c.l.b16 %v134
    %v408 = vunpack.c.l.b16 %v135
    %v409 = vunpack.c.l.b16 %v136
    %v410 = vunpack.c.l.b16 %v137
    %v411 = vunpack.c.l.b16 %v138
    %v412 = vunpack.c.l.b16 %v139
    %v413 = vunpack.c.l.b16 %v140
    %v414 = vunpack.c.l.b16 %v141
    %v415 = vunpack.c.l.b16 %v142
    %v416 = vunpack.c.l.b16 %v143
    %v417 = vunpack.c.l.b16 %v144
    %v418 = vunpack.c.l.b16 %v145
    %v419 = vunpack.c.l.b16 %v146
    %v420 = vunpack.c.l.b16 %v147
    %v421 = vunpack.c.l.b16 %v148
    %v422 = vunpack.c.l.b16 %v149
    %v423 = vunpack.c.l.b16 %v150
    %v424 = vunpack.c.l.b16 %v151
    %v425 = vunpack.c.l.b16 %v152
    %v426 = vunpack.c.l.b16 %v153
    %v427 = vunpack.c.l.b16 %v154
    %v428 = vunpack.c.l.b16 %v155
    %v429 = vunpack.c.l.b16 %v156
    %v430 = vunpack.c.l.b16 %v157
    %v431 = vunpack.c.l.b16 %v158
    %v432 = vunpack.c.l.b16 %v159
    %v433 = vunpack.c.l.b16 %v160
    %v434 = vunpack.c.l.b16 %v161
    %v435 = vunpack.c.l.b16 %v162
    %v436 = vunpack.c.l.b16 %v163
    %v437 = vunpack.c.l.b16 %v164
    %v438 = vunpack.c.l.b16 %v165
    %v439 = vunpack.c.l.b16 %v166
    %v440 = vunpack.c.l.b16 %v167
    %v441 = vunpack.c.l.b16 %v168
    %v442 = vunpack.c.l.b16 %v169
    %v443 = vunpack.c.l.b16 %v170
    %v444 = vunpack.c.l.b16 %v171
    %v445 = vunpack.c.l.b16 %v172
    %v446 = vunpack.c.l.b16 %v173
    %v447 = vunpack.c.l.b16 %v174
    %v448 = vunpack.c.l.b16 %v175
    %v449 = vunpack.c.l.b16 %v176
    %v450 = vunpack.c.l.b16 %v177
    %v451 = vunpack.c.l.b16 %v178
    %v452 = vunpack.c.l.b16 %v179
    %v453 = vunpack.c.l.b16 %v180
    %v454 = vunpack.c.l.b16 %v181
    %v455 = vunpack.c.l.b16 %v182
    %v456 = vunpack.c.l.b16 %v183
    %v457 = vunpack.c.l.b16 %v184
    %v458 = vunpack.c.l.b16 %v185
    %v459 = vunpack.c.l.b16 %v186
    %v460 = vunpack.c.l.b16 %v187
    %v461 = vunpack.c.l.b16 %v188
    %v462 = vunpack.c.l.b16 %v189
    %v463 = vunpack.c.l.b16 %v190
    %v464 = vunpack.c.l.b16 %v191
    %v465 = vunpack.c.l.b16 %v192
    %v466 = vunpack.c.l.b16 %v193
    %v467 = vunpack.c.l.b16 %v194
    %v468 = vunpack.c.l.b16 %v195
    %v469 = vunpack.c.l.b16 %v196
    %v470 = vunpack.c.l.b16 %v197
    %v471 = vunpack.c.l.b16 %v198
    %v472 = vunpack.c.l.b16 %v199
    %v473 = vpack.c.b16 %v346, %v345
    %v474 = vpack.c.b16 %v348, %v347
    %v475 = vpack.c.b16 %v350, %v349
    %v476 = vpack.c.b16 %v352, %v351
    %v477 = vpack.c.b16 %v354, %v353
    %v478 = vpack.c.b16 %v356, %v355
    %v479 = vpack.c.b16 %v358, %v357
    %v480 = vpack.c.b16 %v360, %v359
    %v481 = vpack.c.b16 %v362, %v361
    %v482 = vpack.c.b16 %v364, %v363
    %v483 = vpack.c.b16 %v366, %v365
    %v484 = vpack.c.b16 %v368, %v367
    %v485 = vpack.c.b16 %v370, %v369
    %v486 = vpack.c.b16 %v372, %v371
    %v487 = vpack.c.b16 %v374, %v373
    %v488 = vpack.c.b16 %v376, %v375
    %v489 = vpack.c.b16 %v378, %v377
    %v490 = vpack.c.b16 %v380, %v379
    %v491 = vpack.c.b16 %v382, %v381
    %v492 = vpack.c.b16 %v384, %v383
    %v493 = vpack.c.b16 %v386, %v385
    %v494 = vpack.c.b16 %v388, %v387
    %v495 = vpack.c.b16 %v390, %v389
    %v496 = vpack.c.b16 %v392, %v391
    %v497 = vpack.c.b16 %v394, %v393
    %v498 = vpack.c.b16 %v396, %v395
    %v499 = vpack.c.b16 %v398, %v397
    %v500 = vpack.c.b16 %v400, %v399
    %v501 = vpack.c.b16 %v402, %v401
    %v502 = vpack.c.b16 %v404, %v403
    %v503 = vpack.c.b16 %v406, %v405
    %v504 = vpack.c.b16 %v408, %v407
    %v505 = vpack.c.b16 %v410, %v409
    %v506 = vpack.c.b16 %v412, %v411
    %v507 = vpack.c.b16 %v414, %v413
    %v508 = vpack.c.b16 %v416, %v415
    %v509 = vpack.c.b16 %v418, %v417
    %v510 = vpack.c.b16 %v420, %v419
    %v511 = vpack.c.b16 %v422, %v421
    %v512 = vpack.c.b16 %v424, %v423
    %v513 = vpack.c.b16 %v426, %v425
    %v514 = vpack.c.b16 %v428, %v427
    %v515 = vpack.c.b16 %v430, %v429
    %v516 = vpack.c.b16 %v432, %v431
    %v517 = vpack.c.b16 %v434, %v433
    %v518 = vpack.c.b16 %v436, %v435
    %v519 = vpack.c.b16 %v438, %v437
    %v520 = vpack.c.b16 %v440, %v439
    %v521 = vpack.c.b16 %v442, %v441
    %v522 = vpack.c.b16 %v444, %v443
    %v523 = vpack.c.b16 %v446, %v445
    %v524 = vpack.c.b16 %v448, %v447
    %v525 = vpack.c.b16 %v450, %v449
    %v526 = vpack.c.b16 %v452, %v451
    %v527 = vpack.c.b16 %v454, %v453
    %v528 = vpack.c.b16 %v456, %v455
    %v529 = vpack.c.b16 %v458, %v457
    %v530 = vpack.c.b16 %v460, %v459
    %v531 = vpack.c.b16 %v462, %v461
    %v532 = vpack.c.b16 %v464, %v463
    %v533 = vpack.c.b16 %v466, %v465
    %v534 = vpack.c.b16 %v468, %v467
    %v535 = vpack.c.b16 %v470, %v469
    %v536 = vpack.c.b16 %v472, %v471
    %601 = vmatpush.bf16.msra.mxu0 %v480
    %602 = vmatpush.bf16.msra.mxu0 %v479
    %603 = vmatpush.bf16.msra.mxu0 %v478
    %604 = vmatpush.bf16.msra.mxu0 %v477
    %605 = vmatpush.bf16.msra.mxu0 %v476
    %606 = vmatpush.bf16.msra.mxu0 %v475
    %607 = vmatpush.bf16.msra.mxu0 %v474
    %608 = vmatpush.bf16.msra.mxu0 %v473
    %609 = vmatmul.bf16.gmra.mxu0 %v209
    %v610 = vpop.f32.mrf.mxu0
    %v611 = vadd.f32 0.0, %v610
    %v612 = vpop.f32.mrf.mxu0
    %613 = vdwg.mxu0
    %614 = vmatpush.bf16.msra.mxu0 %v488
    %615 = vmatpush.bf16.msra.mxu0 %v487
    %616 = vmatpush.bf16.msra.mxu0 %v486
    %617 = vmatpush.bf16.msra.mxu0 %v485
    %618 = vmatpush.bf16.msra.mxu0 %v484
    %619 = vmatpush.bf16.msra.mxu0 %v483
    %620 = vmatpush.bf16.msra.mxu0 %v482
    %621 = vmatpush.bf16.msra.mxu0 %v481
    %622 = vmatmul.bf16.gmra.mxu0 %v210
    %v623 = vpop.f32.mrf.mxu0
    %v624 = vadd.f32 %v611, %v623
    %v625 = vpop.f32.mrf.mxu0
    %626 = vdwg.mxu0
    %627 = vmatpush.bf16.msra.mxu0 %v496
    %628 = vmatpush.bf16.msra.mxu0 %v495
    %629 = vmatpush.bf16.msra.mxu0 %v494
    %630 = vmatpush.bf16.msra.mxu0 %v493
    %631 = vmatpush.bf16.msra.mxu0 %v492
    %632 = vmatpush.bf16.msra.mxu0 %v491
    %633 = vmatpush.bf16.msra.mxu0 %v490
    %634 = vmatpush.bf16.msra.mxu0 %v489
    %635 = vmatmul.bf16.gmra.mxu0 %v211
    %v636 = vpop.f32.mrf.mxu0
    %v637 = vadd.f32 %v624, %v636
    %v638 = vpop.f32.mrf.mxu0
    %639 = vdwg.mxu0
    %640 = vmatpush.bf16.msra.mxu0 %v504
    %641 = vmatpush.bf16.msra.mxu0 %v503
    %642 = vmatpush.bf16.msra.mxu0 %v502
    %643 = vmatpush.bf16.msra.mxu0 %v501
    %644 = vmatpush.bf16.msra.mxu0 %v500
    %645 = vmatpush.bf16.msra.mxu0 %v499
    %646 = vmatpush.bf16.msra.mxu0 %v498
    %647 = vmatpush.bf16.msra.mxu0 %v497
    %648 = vmatmul.bf16.gmra.mxu0 %v212
    %v649 = vpop.f32.mrf.mxu0
    %v650 = vadd.f32 %v637, %v649
    %v651 = vpop.f32.mrf.mxu0
    %652 = vdwg.mxu0
    %653 = vmatpush.bf16.msra.mxu0 %v512
    %654 = vmatpush.bf16.msra.mxu0 %v511
    %655 = vmatpush.bf16.msra.mxu0 %v510
    %656 = vmatpush.bf16.msra.mxu0 %v509
    %657 = vmatpush.bf16.msra.mxu0 %v508
    %658 = vmatpush.bf16.msra.mxu0 %v507
    %659 = vmatpush.bf16.msra.mxu0 %v506
    %660 = vmatpush.bf16.msra.mxu0 %v505
    %661 = vmatmul.bf16.gmra.mxu0 %v213
    %v662 = vpop.f32.mrf.mxu0
    %v663 = vadd.f32 %v650, %v662
    %v664 = vpop.f32.mrf.mxu0
    %665 = vdwg.mxu0
    %666 = vmatpush.bf16.msra.mxu0 %v520
    %667 = vmatpush.bf16.msra.mxu0 %v519
    %668 = vmatpush.bf16.msra.mxu0 %v518
    %669 = vmatpush.bf16.msra.mxu0 %v517
    %670 = vmatpush.bf16.msra.mxu0 %v516
    %671 = vmatpush.bf16.msra.mxu0 %v515
    %672 = vmatpush.bf16.msra.mxu0 %v514
    %673 = vmatpush.bf16.msra.mxu0 %v513
    %674 = vmatmul.bf16.gmra.mxu0 %v214
    %v675 = vpop.f32.mrf.mxu0
    %v676 = vadd.f32 %v663, %v675
    %v677 = vpop.f32.mrf.mxu0
    %678 = vdwg.mxu0
    %679 = vmatpush.bf16.msra.mxu0 %v528
    %680 = vmatpush.bf16.msra.mxu0 %v527
    %681 = vmatpush.bf16.msra.mxu0 %v526
    %682 = vmatpush.bf16.msra.mxu0 %v525
    %683 = vmatpush.bf16.msra.mxu0 %v524
    %684 = vmatpush.bf16.msra.mxu0 %v523
    %685 = vmatpush.bf16.msra.mxu0 %v522
    %686 = vmatpush.bf16.msra.mxu0 %v521
    %687 = vmatmul.bf16.gmra.mxu0 %v215
    %v688 = vpop.f32.mrf.mxu0
    %v689 = vadd.f32 %v676, %v688
    %v690 = vpop.f32.mrf.mxu0
    %691 = vdwg.mxu0
    %692 = vmatpush.bf16.msra.mxu0 %v536
    %693 = vmatpush.bf16.msra.mxu0 %v535
    %694 = vmatpush.bf16.msra.mxu0 %v534
    %695 = vmatpush.bf16.msra.mxu0 %v533
    %696 = vmatpush.bf16.msra.mxu0 %v532
    %697 = vmatpush.bf16.msra.mxu0 %v531
    %698 = vmatpush.bf16.msra.mxu0 %v530
    %699 = vmatpush.bf16.msra.mxu0 %v529
    %700 = vmatmul.bf16.gmra.mxu0 %v216
    %v701 = vpop.f32.mrf.mxu0
    %v702 = vadd.f32 %v689, %v701
    %v703 = vpop.f32.mrf.mxu0
    %704 = vdwg.mxu0
    %v705 = vadd.f32 %v200, %v702
    %706 = vst [vmem:[#allocation2] sm:$0xff] %v705
    // Predicated region
    $region38: #{tpu_custom_call.1} parent=1 // pred_check
      %p707 = pneg %p67
    $region39: #{tpu_custom_call.1} parent=1 // pred_check_branch
      %709 = sbr.rel (%p707) target = $region41
    $region40: #{tpu_custom_call.1} parent=1 // pred_region
      %v710 = vld [vmem:[#allocation2] sm:$0xff]
      %v711 = vld [vmem:[%s3] sm:$0x1]
      %v713 = vperm.slane %v711, 0
      %v715 = vadd.f32 %v710, %v713
      %v716 = vmul.f32 %v715, %v715
      %717 = vadd.xlane.f32.xlu0 %v716
      %v718 = vpop.xlane.xlu0 %717
      %s719 = sld [smem:[#allocation3]]
      %v720 = vstv %s719
      %v721 = vmul.f32 %v720, 1.442695
      %v722 = vpow.pop %v721
      %s723 = vtos %v722
      %v724 = vmax.f32 %v718, 1e-24
      %v725 = vrsqrt.pop %v724
      %v726 = vmul.f32 %v725, %v724
      %v727 = vmul.f32 %v726, %v725
      %v728 = vmul.f32 0.5, %v727
      %v729 = vsub.f32 1.5, %v728
      %v730 = vmul.f32 %v725, %v729
      %vm731 = vweird.f32 %v724
      %vm732 = vweird.f32 %v725
      %vm733 = vmor %vm731, %vm732
      %v734 = vsel %vm733, %v725, %v730
      %v735 = vstv %s723
      %v736 = vmul.f32 %v735, %v734
      %v737 = vmul.f32 %v715, %v736
      %v738 = vpack.c.bf16 %v737, %v737
      %v739 = vld [vmem:[#allocation9] sm:$0xf]
      %v740 = vld [vmem:[#allocation9 + $0x4] sm:$0xf]
      %v741 = vld [vmem:[#allocation9 + $0x8] sm:$0xf]
      %v742 = vld [vmem:[#allocation9 + $0xc] sm:$0xf]
      %v743 = vld [vmem:[#allocation9 + $0x10] sm:$0xf]
      %v744 = vld [vmem:[#allocation9 + $0x14] sm:$0xf]
      %v745 = vld [vmem:[#allocation9 + $0x18] sm:$0xf]
      %v746 = vld [vmem:[#allocation9 + $0x1c] sm:$0xf]
      %v747 = vld [vmem:[#allocation9 + $0x20] sm:$0xf]
      %v748 = vld [vmem:[#allocation9 + $0x24] sm:$0xf]
      %v749 = vld [vmem:[#allocation9 + $0x28] sm:$0xf]
      %v750 = vld [vmem:[#allocation9 + $0x2c] sm:$0xf]
      %v751 = vld [vmem:[#allocation9 + $0x30] sm:$0xf]
      %v752 = vld [vmem:[#allocation9 + $0x34] sm:$0xf]
      %v753 = vld [vmem:[#allocation9 + $0x38] sm:$0xf]
      %v754 = vld [vmem:[#allocation9 + $0x3c] sm:$0xf]
      %v771 = vunpack.c.l.b16 %v739
      %v772 = vunpack.c.l.b16 %v740
      %v773 = vunpack.c.l.b16 %v741
      %v774 = vunpack.c.l.b16 %v742
      %v775 = vunpack.c.l.b16 %v743
      %v776 = vunpack.c.l.b16 %v744
      %v777 = vunpack.c.l.b16 %v745
      %v778 = vunpack.c.l.b16 %v746
      %v779 = vunpack.c.l.b16 %v747
      %v780 = vunpack.c.l.b16 %v748
      %v781 = vunpack.c.l.b16 %v749
      %v782 = vunpack.c.l.b16 %v750
      %v783 = vunpack.c.l.b16 %v751
      %v784 = vunpack.c.l.b16 %v752
      %v785 = vunpack.c.l.b16 %v753
      %v786 = vunpack.c.l.b16 %v754
      %v787 = vpack.c.b16 %v772, %v771
      %v788 = vpack.c.b16 %v774, %v773
      %v789 = vpack.c.b16 %v776, %v775
      %v790 = vpack.c.b16 %v778, %v777
      %v791 = vpack.c.b16 %v780, %v779
      %v792 = vpack.c.b16 %v782, %v781
      %v793 = vpack.c.b16 %v784, %v783
      %v794 = vpack.c.b16 %v786, %v785
      %803 = vmatpush.bf16.msra.mxu0 %v794
      %804 = vmatpush.bf16.msra.mxu0 %v793
      %805 = vmatpush.bf16.msra.mxu0 %v792
      %806 = vmatpush.bf16.msra.mxu0 %v791
      %807 = vmatpush.bf16.msra.mxu0 %v790
      %808 = vmatpush.bf16.msra.mxu0 %v789
      %809 = vmatpush.bf16.msra.mxu0 %v788
      %810 = vmatpush.bf16.msra.mxu0 %v787
      %811 = vmatmul.bf16.gmra.mxu0 %v738
      %v812 = vpop.f32.mrf.mxu0
      %v813 = vadd.f32 0.0, %v812
      %v814 = vpop.f32.mrf.mxu0
      %815 = vdwg.mxu0
      %816 = vst [vmem:[#allocation10] sm:$0xff] %v813
    $region41: #{tpu_custom_call.1} parent=1 // pred_fallthru
      _
    // Predicated region
    $region42: #{tpu_custom_call.1} parent=1 // pred_check
      _
    $region43: #{tpu_custom_call.1} parent=1 // pred_check_branch
      %818 = sbr.rel (0) target = $region45
    $region44: #{tpu_custom_call.1} parent=1 // pred_region
      %820 = vsyncadd [#allocation6], 0
      %s822 = sshll.u32 [#allocation10], 4
      %s823 = int_to_ptr.vmem [resolvable:$true] %s822
      %s824 = sshll.u32 %s5, 4
      %s825 = int_to_ptr.hbm [resolvable:$true] %s824
      %827 = dma.vmem_to_hbm [thread:$0]  %s823, 128, %s825, [#allocation6]
    $region45: #{tpu_custom_call.1} parent=1 // pred_fallthru
      _
    // Predicated region
    $region46: #{tpu_custom_call.1} parent=1 // pred_check
      _
    $region47: #{tpu_custom_call.1} parent=1 // pred_check_branch
      %829 = sbr.rel (0) target = $region49
    $region48: #{tpu_custom_call.1} parent=1 // pred_region
      %831 = dma.done [#allocation6], 128
    $region49: #{tpu_custom_call.1} parent=1 // pred_fallthru
      _
    %832 = vsyncpa [#allocation5], 1
    %833 = vsyncpa [#allocation8], 1
    %834 = vsyncpa [#allocation6], 1

</llo_original>
